<compile_context>
chip_gen: v6e
topology: v6e:2x2x1
jax: 0.10.0
libtpu: 0.0.40
codegen_flags: <defaults>
</compile_context>

<pallas_src>
import jax
import jax.numpy as jnp
from jax.experimental import pallas as pl
from jax.experimental.pallas import tpu as pltpu

LANES = 128                      # vreg lane width: last dim of the slab
DEFAULT_TILE_R = 2048            # rows per grid step -> (2048, 128) f32 = 1 MiB/tile
DEFAULT_MIN_PALLAS_N = 1 << 17   # below this, plain fused XLA is strictly better


def linear_kernel(w_ref, b_ref, x_ref, o_ref):
    # w_ref, b_ref: (1,) f32 scalar-prefetch refs in SMEM.
    # x_ref, o_ref: (TILE_R, 128) f32 tiles in VMEM (lane-dense slab).
    # 1 vld + 2 VALU + 1 vst per vreg -> entirely hidden under HBM DMA.
    o_ref[...] = x_ref[...] * w_ref[0] + b_ref[0]


def _linear_pallas(x_slab, w, b, tile_r):
    rows, lanes = x_slab.shape
    grid = (pl.cdiv(rows, tile_r),)   # ragged last block is masked, not padded
    return pl.pallas_call(
        linear_kernel,
        out_shape=jax.ShapeDtypeStruct((rows, lanes), jnp.float32),
        grid_spec=pltpu.PrefetchScalarGridSpec(
            num_scalar_prefetch=2,    # w, b -> SMEM once, before the grid runs
            grid=grid,
            in_specs=[
                pl.BlockSpec((tile_r, lanes), lambda i, w_ref, b_ref: (i, 0)),
            ],
            out_specs=pl.BlockSpec((tile_r, lanes), lambda i, w_ref, b_ref: (i, 0)),
        ),
        # On v7x, pltpu.CORE_PARALLEL would split the row grid across both
        # TensorCores; "parallel" is the portable choice across v5e/v6e/v7x.
        compiler_params=pltpu.CompilerParams(
            dimension_semantics=("parallel",),
        ),
    )(w, b, x_slab)


def simple_model_forward(x, weight, bias, *, tile_r=DEFAULT_TILE_R,
                         min_pallas_n=DEFAULT_MIN_PALLAS_N):
    """JAX/Pallas equivalent of SimpleModel.forward (nn.Linear(1, 1)).

    x:      (N, 1) float32
    weight: (1, 1) float32  (PyTorch Linear weight, shape (out, in))
    bias:   (1,)   float32
    returns (N, 1) float32
    """
    n = x.shape[0]
    w = weight.reshape(1).astype(jnp.float32)   # (1,)
    b = bias.reshape(1).astype(jnp.float32)     # (1,)
    xf = x.astype(jnp.float32)

    # Fast path: tiny batches (launch overhead >> useful work) or lane-unaligned
    # N (a repack would add extra full HBM passes that the kernel body can never
    # win back). XLA's fused x*w+b is already minimal traffic: 1 read + 1 write.
    if n < min_pallas_n or n % LANES != 0:
        return xf * w[0] + b[0]

    rows = n // LANES
    # tile_r is a multiple of 8; if rows < tile_r the block spans the full
    # (rows, 128) array, which is also a legal TPU block shape.
    tile_r_eff = min(tile_r, rows)

    slab = xf.reshape(rows, LANES)              # free bitcast (contiguous)
    out_slab = _linear_pallas(slab, w, b, tile_r_eff)
    return out_slab.reshape(n, 1)               # free bitcast back


if __name__ == "__main__":
    key = jax.random.PRNGKey(0)
    kw, kb, k1, k2, k3 = jax.random.split(key, 5)

    # Deterministic parameters (mimic Linear(1,1) param shapes).
    weight = jax.random.normal(kw, (1, 1), dtype=jnp.float32)   # (out=1, in=1)
    bias = jax.random.normal(kb, (1,), dtype=jnp.float32)       # (out=1,)

    def ref(x):
        return x @ weight.T + bias

    # Case 1: tiny batch -> plain fused-XLA fast path.
    x_small = jax.random.normal(k1, (8, 1), dtype=jnp.float32)
    y_small = jax.block_until_ready(simple_model_forward(x_small, weight, bias))
    assert y_small.shape == (8, 1)
    assert jnp.allclose(y_small, ref(x_small), atol=1e-6), "small-batch mismatch"

    # Case 2: lane-unaligned batch -> fused-XLA fallback (no repack passes).
    x_unaligned = jax.random.normal(k2, (3000, 1), dtype=jnp.float32)
    y_unaligned = jax.block_until_ready(
        simple_model_forward(x_unaligned, weight, bias))
    assert y_unaligned.shape == (3000, 1)
    assert jnp.allclose(y_unaligned, ref(x_unaligned), atol=1e-6), \
        "fallback-path mismatch"

    # Case 3: lane-aligned batch -> Pallas streaming kernel with default params.
    # N = 3000*128 -> rows=3000 -> grid=2 with a ragged (masked) last block.
    n_big = 3000 * LANES
    x_big = jax.random.normal(k3, (n_big, 1), dtype=jnp.float32)
    y_big = jax.block_until_ready(simple_model_forward(x_big, weight, bias))
    assert y_big.shape == (n_big, 1)
    assert jnp.allclose(y_big, ref(x_big), atol=1e-6), "pallas-path mismatch"

    print("KERNEL_OK")
</pallas_src>

<mosaic_0001>
module attributes {stable_mosaic.version = 11 : i64} {
  func.func @linear_kernel(%arg0: i32, %arg1: memref<1xf32, #tpu.memory_space<smem>>, %arg2: memref<1xf32, #tpu.memory_space<smem>>, %arg3: memref<2048x128xf32, #tpu.memory_space<vmem>>, %arg4: memref<2048x128xf32, #tpu.memory_space<vmem>>) attributes {dimension_semantics = [#tpu.dimension_semantics<parallel>], iteration_bounds = array<i64: 2>, scalar_prefetch = 2 : i64, scratch_operands = 0 : i64, tpu.core_type = #tpu.core_type<tc>, window_params = [{transform_indices = @transform_0, window_bounds = array<i64: 2048, 128>}, {transform_indices = @transform_1, window_bounds = array<i64: 2048, 128>}]} {
    %c0 = arith.constant 0 : index
    %c0_0 = arith.constant 0 : index
    %0 = vector.load %arg3[%c0, %c0_0] : memref<2048x128xf32, #tpu.memory_space<vmem>>, vector<2048x128xf32>
    %c0_1 = arith.constant 0 : index
    %1 = memref.load %arg1[%c0_1] : memref<1xf32, #tpu.memory_space<smem>>
    %2 = vector.broadcast %1 : f32 to vector<2048x128xf32>
    %3 = arith.mulf %0, %2 : vector<2048x128xf32>
    %c0_2 = arith.constant 0 : index
    %4 = memref.load %arg2[%c0_2] : memref<1xf32, #tpu.memory_space<smem>>
    %5 = vector.broadcast %4 : f32 to vector<2048x128xf32>
    %6 = arith.addf %3, %5 : vector<2048x128xf32>
    %c0_3 = arith.constant 0 : index
    %c0_4 = arith.constant 0 : index
    %7 = vector.load %arg4[%c0_3, %c0_4] : memref<2048x128xf32, #tpu.memory_space<vmem>>, vector<2048x128xf32>
    tpu.vector_store %arg4[%c0_3, %c0_4], %6 {strides = array<i32>} : memref<2048x128xf32, #tpu.memory_space<vmem>>, vector<2048x128xf32>,
    return
  }
  func.func @transform_0(%arg0: i32, %arg1: memref<1xf32, #tpu.memory_space<smem>>, %arg2: memref<1xf32, #tpu.memory_space<smem>>) -> (i32, i32) {
    %c0_i32 = arith.constant 0 : i32
    %c0_i32_0 = arith.constant 0 : i32
    return %arg0, %c0_i32 : i32, i32
  }
  func.func @transform_1(%arg0: i32, %arg1: memref<1xf32, #tpu.memory_space<smem>>, %arg2: memref<1xf32, #tpu.memory_space<smem>>) -> (i32, i32) {
    %c0_i32 = arith.constant 0 : i32
    %c0_i32_0 = arith.constant 0 : i32
    return %arg0, %c0_i32 : i32, i32
  }
}

</mosaic_0001>

<llo_original>
// kernel: tpu_custom_call.1
$region0: #{tpu_custom_call.1}
  #allocation0 [shape = 'u32[]', space=smem, size = 0x4, offset = 0x4, fixed_abs, tag = 'smem constant byte address 0x4 - core index']
  #allocation1 [shape = 'u32[144,128]{1,0:T(1,128)}', space=vmem, size = 0x12000, scoped, tag = 'internal scratch']
  #allocation2 [shape = 's32[1]{0}', space=sflag, size = 0x4, scoped, tag = 'scoped memory for tpu_custom_call.1']
  #allocation3 [shape = 'f32[1]{0:T(128)S(6)}', space=smem, size = 0x200, scoped, tag = 'prefetched SMEM operand 0']
  #allocation4 [shape = 'f32[1]{0:T(128)S(6)}', space=smem, size = 0x200, scoped, tag = 'prefetched SMEM operand 1']
  %s0 = inlined_call_operand.<no memory space> [shape: f32[1], index: 0, kind: input, shape index: {}]
  %s1 = inlined_call_operand.<no memory space> [shape: f32[1], index: 1, kind: input, shape index: {}]
  %s2 = inlined_call_operand.hbm [shape: f32[3000,128], index: 2, kind: input, shape index: {}]
  %s3 = inlined_call_operand.hbm [shape: f32[3000,128], index: 3, kind: output, shape index: {}]
  %s4 = sld [smem:[#allocation0]]
  $region41: #{tpu_custom_call.1} parent=0
    _
  %s6 = ssub.s32 1, %s4
  %s7 = scalar_select 0, %s6, %s4
  %8 = sst [smem:[#allocation3]] %s0
  %9 = sst [smem:[#allocation4]] %s1
  $region1: #{tpu_custom_call.1} parent=0
    #allocation5 [shape = 'u8[2097152]{0}', space=vmem, size = 0x200000, scoped, tag = 'input window, operand 2']
    #allocation6 [shape = 's32[2]{0}', space=sflag, size = 0x8, scoped, tag = 'scoped memory for tpu_custom_call.1']
    #allocation7 [shape = 's32[2]{0}', space=sflag, size = 0x8, scoped, tag = 'scoped memory for tpu_custom_call.1']
    #allocation8 [shape = 'u8[2097152]{0}', space=vmem, size = 0x200000, scoped, tag = 'output window, operand 0']
    %10 = vsyncpa [#allocation6], 0
    %s11 = scalar_lea.sflag [#allocation6], 1
    %12 = vsyncpa %s11, 0
    %13 = vsyncpa [#allocation7], 0
    %s14 = scalar_lea.sflag [#allocation7], 1
    %15 = vsyncpa %s14, 0
    loop: start=0, step=1, limit=4
    $region2: #{tpu_custom_call.1} parent=1 // loop_pre_header
      _
    $region3: #{tpu_custom_call.1} parent=1 // loop_header
      %s17 = sphi 0, %s21
      %p18 = scmp.ge.s32.totalorder %s17, 4
      %s27 = sphi 0, %s29
      %s30 = sphi 0, %s27
      %s31 = sphi 0, %s30
      %s47 = sphi 0, %s31
      %s53 = sphi 0, %s55
      %s56 = sphi 0, %s53
      %s57 = sphi 0, %s56
      %s73 = sphi 0, %s57
    $region4: #{tpu_custom_call.1} parent=1 // loop_header_branch
      %20 = sbr.rel (%p18) target = $region8
    $region5: #{tpu_custom_call.1} parent=1 // loop_body
      %s22 = ssub.s32 %s17, 1
      %s23 = ssub.s32 %s17, 2
      %s24 = sadd.s32 %s17, 1
      %s25 = ssub.s32 %s17, %s24
      %p26 = scmp.eq.s32.totalorder %s25, 0
      %s28 = sadd.s32 %s27, 1
      %s29 = scalar_select %p26, %s27, %s28
      %p32 = pneg %p26
      %p33 = scmp.eq.s32.totalorder %s17, 1
      %p34 = por %p32, %p33
      %p35 = scmp.ne.s32.totalorder %s27, %s30
      %p36 = scmp.eq.s32.totalorder %s17, 0
      %p37 = por %p35, %p36
      %p38 = scmp.ne.s32.totalorder %s27, %s30
      %p39 = scmp.eq.s32.totalorder %s22, 1
      %p40 = por %p38, %p39
      %p41 = scmp.ne.s32.totalorder %s30, %s31
      %p42 = scmp.eq.s32.totalorder %s22, 0
      %p43 = por %p41, %p42
      %p44 = scmp.ne.s32.totalorder %s30, %s31
      %p45 = scmp.eq.s32.totalorder %s23, 1
      %p46 = por %p44, %p45
      %p48 = scmp.ne.s32.totalorder %s31, %s47
      %p49 = scmp.eq.s32.totalorder %s23, 0
      %p50 = por %p48, %p49
      %s51 = ssub.s32 %s17, %s24
      %p52 = scmp.eq.s32.totalorder %s51, 0
      %s54 = sadd.s32 %s53, 1
      %s55 = scalar_select %p52, %s53, %s54
      %p58 = pneg %p52
      %p59 = scmp.eq.s32.totalorder %s17, 1
      %p60 = por %p58, %p59
      %p61 = scmp.ne.s32.totalorder %s53, %s56
      %p62 = scmp.eq.s32.totalorder %s17, 0
      %p63 = por %p61, %p62
      %p64 = scmp.ne.s32.totalorder %s53, %s56
      %p65 = scmp.eq.s32.totalorder %s22, 1
      %p66 = por %p64, %p65
      %p67 = scmp.ne.s32.totalorder %s56, %s57
      %p68 = scmp.eq.s32.totalorder %s22, 0
      %p69 = por %p67, %p68
      %p70 = scmp.ne.s32.totalorder %s56, %s57
      %p71 = scmp.eq.s32.totalorder %s23, 1
      %p72 = por %p70, %p71
      %p74 = scmp.ne.s32.totalorder %s57, %s73
      %p75 = scmp.eq.s32.totalorder %s23, 0
      %p76 = por %p74, %p75
      %p77 = scmp.le.s32.totalorder 1, %s17
      %p78 = scmp.lt.s32.totalorder %s17, 3
      %p79 = pnand %p77, %p78
      %p80 = pneg %p79
      // Predicated region
      $region9: #{tpu_custom_call.1} parent=5 // pred_check
        _
      $region10: #{tpu_custom_call.1} parent=5 // pred_check_branch
        %82 = sbr.rel (%p79) target = $region12
      $region11: #{tpu_custom_call.1} parent=5 // pred_region
        %s83 = ssub.s32 %s17, 1
      $region12: #{tpu_custom_call.1} parent=5 // pred_fallthru
        _
      %p84 = scmp.lt.s32.totalorder %s17, 2
      // Predicated region
      $region13: #{tpu_custom_call.1} parent=5 // pred_check
        %p85 = pneg %p84
      $region14: #{tpu_custom_call.1} parent=5 // pred_check_branch
        %87 = sbr.rel (%p85) target = $region16
      $region15: #{tpu_custom_call.1} parent=5 // pred_region
        // Predicated region
        $region17: #{tpu_custom_call.1} parent=15 // pred_check
          %p88 = pneg %p37
        $region18: #{tpu_custom_call.1} parent=15 // pred_check_branch
          %90 = sbr.rel (%p88) target = $region20
        $region19: #{tpu_custom_call.1} parent=15 // pred_region
          %s91 = sand.u32 %s27, 1
          %s92 = scalar_lea.sflag [#allocation6], %s91
          %s93 = sand.u32 %s27, 1
          %s94 = smul.addr %s93, 2048
          %s95 = scalar_lea.vmem [#allocation5], %s94
          %s96 = smul.u32 256, %s17
          %s97 = ssub.s32 375, %s96
          %p98 = scmp.lt.s32.totalorder %s97, 256
          %s99 = scalar_select %p98, %s97, 256
          %s100 = smul.u32 128, %s99
          %s102 = ssub.s32 32768, %s100
          %103 = vsyncadd %s92, %s102
          %p104 = scmp.ne.s32.totalorder 0, %s100
          %s105 = smul.addr %s96, 128
          %s106 = scalar_lea.hbm %s2, %s105
          %s107 = smul.u32 8, %s99
          %s108 = sshll.u32 %s95, 4
          %s109 = int_to_ptr.vmem [resolvable:$true] %s108
          %s110 = sshll.u32 %s107, 4
          %114 = dma.hbm_to_vmem [thread:$0]  (%p104), %s106, %s110, %s109, %s92, 128, 128, 8
        $region20: #{tpu_custom_call.1} parent=15 // pred_fallthru
          _
      $region16: #{tpu_custom_call.1} parent=5 // pred_fallthru
        _
      %p115 = scmp.le.s32.totalorder 1, %s17
      %p116 = scmp.lt.s32.totalorder %s17, 3
      %p117 = pnand %p115, %p116
      %p118 = pneg %p117
      // Predicated region
      $region21: #{tpu_custom_call.1} parent=5 // pred_check
        _
      $region22: #{tpu_custom_call.1} parent=5 // pred_check_branch
        %120 = sbr.rel (%p117) target = $region24
      $region23: #{tpu_custom_call.1} parent=5 // pred_region
        %s121 = ssub.s32 %s17, 1
        %s122 = sand.u32 %s30, 1
        %s123 = scalar_lea.sflag [#allocation6], %s122
        %s124 = sand.u32 %s30, 1
        %s125 = smul.addr %s124, 2048
        %s126 = scalar_lea.vmem [#allocation5], %s125
        // Predicated region
        $region25: #{tpu_custom_call.1} parent=23 // pred_check
          %p127 = pneg %p43
        $region26: #{tpu_custom_call.1} parent=23 // pred_check_branch
          %129 = sbr.rel (%p127) target = $region28
        $region27: #{tpu_custom_call.1} parent=23 // pred_region
          %130 = dma.done %s123, 32768
        $region28: #{tpu_custom_call.1} parent=23 // pred_fallthru
          _
        %s131 = sand.u32 %s30, 1
        %s132 = scalar_lea.sflag [#allocation6], %s131
        %s133 = sand.u32 %s30, 1
        %s134 = smul.addr %s133, 2048
        %s135 = scalar_lea.vmem [#allocation5], %s134
        %p136 = pneg %p43
        %p137 = pneg %p40
        %p138 = pneg %p69
        %p139 = pneg %p66
        %s140 = sand.u32 %s56, 1
        %s141 = scalar_lea.sflag [#allocation7], %s140
        %s142 = sand.u32 %s56, 1
        %s143 = smul.addr %s142, 2048
        %s144 = scalar_lea.vmem [#allocation8], %s143
        %s145 = smul.u32 256, %s22
        %s146 = ssub.s32 375, %s145
        %p147 = scmp.lt.s32.totalorder %s146, 256
        %s148 = scalar_select %p147, %s146, 256
        %s149 = smul.u32 128, %s148
        %s150 = smul.u32 256, %s22
        %s151 = ssub.s32 375, %s150
        %p152 = scmp.lt.s32.totalorder %s151, 256
        %s153 = scalar_select %p152, %s151, 256
        %s154 = smul.u32 128, %s153
        %v155 = vld [vmem:[%s126] sm:$0xff]
        %v156 = vld [vmem:[%s126 + $0x8] sm:$0xff]
        %v157 = vld [vmem:[%s126 + $0x10] sm:$0xff]
        %v158 = vld [vmem:[%s126 + $0x18] sm:$0xff]
        %v159 = vld [vmem:[%s126 + $0x20] sm:$0xff]
        %v160 = vld [vmem:[%s126 + $0x28] sm:$0xff]
        %v161 = vld [vmem:[%s126 + $0x30] sm:$0xff]
        %v162 = vld [vmem:[%s126 + $0x38] sm:$0xff]
        %v163 = vld [vmem:[%s126 + $0x40] sm:$0xff]
        %v164 = vld [vmem:[%s126 + $0x48] sm:$0xff]
        %v165 = vld [vmem:[%s126 + $0x50] sm:$0xff]
        %v166 = vld [vmem:[%s126 + $0x58] sm:$0xff]
        %v167 = vld [vmem:[%s126 + $0x60] sm:$0xff]
        %v168 = vld [vmem:[%s126 + $0x68] sm:$0xff]
        %v169 = vld [vmem:[%s126 + $0x70] sm:$0xff]
        %v170 = vld [vmem:[%s126 + $0x78] sm:$0xff]
        %v171 = vld [vmem:[%s126 + $0x80] sm:$0xff]
        %v172 = vld [vmem:[%s126 + $0x88] sm:$0xff]
        %v173 = vld [vmem:[%s126 + $0x90] sm:$0xff]
        %v174 = vld [vmem:[%s126 + $0x98] sm:$0xff]
        %v175 = vld [vmem:[%s126 + $0xa0] sm:$0xff]
        %v176 = vld [vmem:[%s126 + $0xa8] sm:$0xff]
        %v177 = vld [vmem:[%s126 + $0xb0] sm:$0xff]
        %v178 = vld [vmem:[%s126 + $0xb8] sm:$0xff]
        %v179 = vld [vmem:[%s126 + $0xc0] sm:$0xff]
        %v180 = vld [vmem:[%s126 + $0xc8] sm:$0xff]
        %v181 = vld [vmem:[%s126 + $0xd0] sm:$0xff]
        %v182 = vld [vmem:[%s126 + $0xd8] sm:$0xff]
        %v183 = vld [vmem:[%s126 + $0xe0] sm:$0xff]
        %v184 = vld [vmem:[%s126 + $0xe8] sm:$0xff]
        %v185 = vld [vmem:[%s126 + $0xf0] sm:$0xff]
        %v186 = vld [vmem:[%s126 + $0xf8] sm:$0xff]
        %v187 = vld [vmem:[%s126 + $0x100] sm:$0xff]
        %v188 = vld [vmem:[%s126 + $0x108] sm:$0xff]
        %v189 = vld [vmem:[%s126 + $0x110] sm:$0xff]
        %v190 = vld [vmem:[%s126 + $0x118] sm:$0xff]
        %v191 = vld [vmem:[%s126 + $0x120] sm:$0xff]
        %v192 = vld [vmem:[%s126 + $0x128] sm:$0xff]
        %v193 = vld [vmem:[%s126 + $0x130] sm:$0xff]
        %v194 = vld [vmem:[%s126 + $0x138] sm:$0xff]
        %v195 = vld [vmem:[%s126 + $0x140] sm:$0xff]
        %v196 = vld [vmem:[%s126 + $0x148] sm:$0xff]
        %v197 = vld [vmem:[%s126 + $0x150] sm:$0xff]
        %v198 = vld [vmem:[%s126 + $0x158] sm:$0xff]
        %v199 = vld [vmem:[%s126 + $0x160] sm:$0xff]
        %v200 = vld [vmem:[%s126 + $0x168] sm:$0xff]
        %v201 = vld [vmem:[%s126 + $0x170] sm:$0xff]
        %v202 = vld [vmem:[%s126 + $0x178] sm:$0xff]
        %v203 = vld [vmem:[%s126 + $0x180] sm:$0xff]
        %v204 = vld [vmem:[%s126 + $0x188] sm:$0xff]
        %v205 = vld [vmem:[%s126 + $0x190] sm:$0xff]
        %v206 = vld [vmem:[%s126 + $0x198] sm:$0xff]
        %v207 = vld [vmem:[%s126 + $0x1a0] sm:$0xff]
        %v208 = vld [vmem:[%s126 + $0x1a8] sm:$0xff]
        %v209 = vld [vmem:[%s126 + $0x1b0] sm:$0xff]
        %v210 = vld [vmem:[%s126 + $0x1b8] sm:$0xff]
        %v211 = vld [vmem:[%s126 + $0x1c0] sm:$0xff]
        %v212 = vld [vmem:[%s126 + $0x1c8] sm:$0xff]
        %v213 = vld [vmem:[%s126 + $0x1d0] sm:$0xff]
        %v214 = vld [vmem:[%s126 + $0x1d8] sm:$0xff]
        %v215 = vld [vmem:[%s126 + $0x1e0] sm:$0xff]
        %v216 = vld [vmem:[%s126 + $0x1e8] sm:$0xff]
        %v217 = vld [vmem:[%s126 + $0x1f0] sm:$0xff]
        %v218 = vld [vmem:[%s126 + $0x1f8] sm:$0xff]
        %v219 = vld [vmem:[%s126 + $0x200] sm:$0xff]
        %v220 = vld [vmem:[%s126 + $0x208] sm:$0xff]
        %v221 = vld [vmem:[%s126 + $0x210] sm:$0xff]
        %v222 = vld [vmem:[%s126 + $0x218] sm:$0xff]
        %v223 = vld [vmem:[%s126 + $0x220] sm:$0xff]
        %v224 = vld [vmem:[%s126 + $0x228] sm:$0xff]
        %v225 = vld [vmem:[%s126 + $0x230] sm:$0xff]
        %v226 = vld [vmem:[%s126 + $0x238] sm:$0xff]
        %v227 = vld [vmem:[%s126 + $0x240] sm:$0xff]
        %v228 = vld [vmem:[%s126 + $0x248] sm:$0xff]
        %v229 = vld [vmem:[%s126 + $0x250] sm:$0xff]
        %v230 = vld [vmem:[%s126 + $0x258] sm:$0xff]
        %v231 = vld [vmem:[%s126 + $0x260] sm:$0xff]
        %v232 = vld [vmem:[%s126 + $0x268] sm:$0xff]
        %v233 = vld [vmem:[%s126 + $0x270] sm:$0xff]
        %v234 = vld [vmem:[%s126 + $0x278] sm:$0xff]
        %v235 = vld [vmem:[%s126 + $0x280] sm:$0xff]
        %v236 = vld [vmem:[%s126 + $0x288] sm:$0xff]
        %v237 = vld [vmem:[%s126 + $0x290] sm:$0xff]
        %v238 = vld [vmem:[%s126 + $0x298] sm:$0xff]
        %v239 = vld [vmem:[%s126 + $0x2a0] sm:$0xff]
        %v240 = vld [vmem:[%s126 + $0x2a8] sm:$0xff]
        %v241 = vld [vmem:[%s126 + $0x2b0] sm:$0xff]
        %v242 = vld [vmem:[%s126 + $0x2b8] sm:$0xff]
        %v243 = vld [vmem:[%s126 + $0x2c0] sm:$0xff]
        %v244 = vld [vmem:[%s126 + $0x2c8] sm:$0xff]
        %v245 = vld [vmem:[%s126 + $0x2d0] sm:$0xff]
        %v246 = vld [vmem:[%s126 + $0x2d8] sm:$0xff]
        %v247 = vld [vmem:[%s126 + $0x2e0] sm:$0xff]
        %v248 = vld [vmem:[%s126 + $0x2e8] sm:$0xff]
        %v249 = vld [vmem:[%s126 + $0x2f0] sm:$0xff]
        %v250 = vld [vmem:[%s126 + $0x2f8] sm:$0xff]
        %v251 = vld [vmem:[%s126 + $0x300] sm:$0xff]
        %v252 = vld [vmem:[%s126 + $0x308] sm:$0xff]
        %v253 = vld [vmem:[%s126 + $0x310] sm:$0xff]
        %v254 = vld [vmem:[%s126 + $0x318] sm:$0xff]
        %v255 = vld [vmem:[%s126 + $0x320] sm:$0xff]
        %v256 = vld [vmem:[%s126 + $0x328] sm:$0xff]
        %v257 = vld [vmem:[%s126 + $0x330] sm:$0xff]
        %v258 = vld [vmem:[%s126 + $0x338] sm:$0xff]
        %v259 = vld [vmem:[%s126 + $0x340] sm:$0xff]
        %v260 = vld [vmem:[%s126 + $0x348] sm:$0xff]
        %v261 = vld [vmem:[%s126 + $0x350] sm:$0xff]
        %v262 = vld [vmem:[%s126 + $0x358] sm:$0xff]
        %v263 = vld [vmem:[%s126 + $0x360] sm:$0xff]
        %v264 = vld [vmem:[%s126 + $0x368] sm:$0xff]
        %v265 = vld [vmem:[%s126 + $0x370] sm:$0xff]
        %v266 = vld [vmem:[%s126 + $0x378] sm:$0xff]
        %v267 = vld [vmem:[%s126 + $0x380] sm:$0xff]
        %v268 = vld [vmem:[%s126 + $0x388] sm:$0xff]
        %v269 = vld [vmem:[%s126 + $0x390] sm:$0xff]
        %v270 = vld [vmem:[%s126 + $0x398] sm:$0xff]
        %v271 = vld [vmem:[%s126 + $0x3a0] sm:$0xff]
        %v272 = vld [vmem:[%s126 + $0x3a8] sm:$0xff]
        %v273 = vld [vmem:[%s126 + $0x3b0] sm:$0xff]
        %v274 = vld [vmem:[%s126 + $0x3b8] sm:$0xff]
        %v275 = vld [vmem:[%s126 + $0x3c0] sm:$0xff]
        %v276 = vld [vmem:[%s126 + $0x3c8] sm:$0xff]
        %v277 = vld [vmem:[%s126 + $0x3d0] sm:$0xff]
        %v278 = vld [vmem:[%s126 + $0x3d8] sm:$0xff]
        %v279 = vld [vmem:[%s126 + $0x3e0] sm:$0xff]
        %v280 = vld [vmem:[%s126 + $0x3e8] sm:$0xff]
        %v281 = vld [vmem:[%s126 + $0x3f0] sm:$0xff]
        %v282 = vld [vmem:[%s126 + $0x3f8] sm:$0xff]
        %v283 = vld [vmem:[%s126 + $0x400] sm:$0xff]
        %v284 = vld [vmem:[%s126 + $0x408] sm:$0xff]
        %v285 = vld [vmem:[%s126 + $0x410] sm:$0xff]
        %v286 = vld [vmem:[%s126 + $0x418] sm:$0xff]
        %v287 = vld [vmem:[%s126 + $0x420] sm:$0xff]
        %v288 = vld [vmem:[%s126 + $0x428] sm:$0xff]
        %v289 = vld [vmem:[%s126 + $0x430] sm:$0xff]
        %v290 = vld [vmem:[%s126 + $0x438] sm:$0xff]
        %v291 = vld [vmem:[%s126 + $0x440] sm:$0xff]
        %v292 = vld [vmem:[%s126 + $0x448] sm:$0xff]
        %v293 = vld [vmem:[%s126 + $0x450] sm:$0xff]
        %v294 = vld [vmem:[%s126 + $0x458] sm:$0xff]
        %v295 = vld [vmem:[%s126 + $0x460] sm:$0xff]
        %v296 = vld [vmem:[%s126 + $0x468] sm:$0xff]
        %v297 = vld [vmem:[%s126 + $0x470] sm:$0xff]
        %v298 = vld [vmem:[%s126 + $0x478] sm:$0xff]
        %v299 = vld [vmem:[%s126 + $0x480] sm:$0xff]
        %v300 = vld [vmem:[%s126 + $0x488] sm:$0xff]
        %v301 = vld [vmem:[%s126 + $0x490] sm:$0xff]
        %v302 = vld [vmem:[%s126 + $0x498] sm:$0xff]
        %v303 = vld [vmem:[%s126 + $0x4a0] sm:$0xff]
        %v304 = vld [vmem:[%s126 + $0x4a8] sm:$0xff]
        %v305 = vld [vmem:[%s126 + $0x4b0] sm:$0xff]
        %v306 = vld [vmem:[%s126 + $0x4b8] sm:$0xff]
        %v307 = vld [vmem:[%s126 + $0x4c0] sm:$0xff]
        %v308 = vld [vmem:[%s126 + $0x4c8] sm:$0xff]
        %v309 = vld [vmem:[%s126 + $0x4d0] sm:$0xff]
        %v310 = vld [vmem:[%s126 + $0x4d8] sm:$0xff]
        %v311 = vld [vmem:[%s126 + $0x4e0] sm:$0xff]
        %v312 = vld [vmem:[%s126 + $0x4e8] sm:$0xff]
        %v313 = vld [vmem:[%s126 + $0x4f0] sm:$0xff]
        %v314 = vld [vmem:[%s126 + $0x4f8] sm:$0xff]
        %v315 = vld [vmem:[%s126 + $0x500] sm:$0xff]
        %v316 = vld [vmem:[%s126 + $0x508] sm:$0xff]
        %v317 = vld [vmem:[%s126 + $0x510] sm:$0xff]
        %v318 = vld [vmem:[%s126 + $0x518] sm:$0xff]
        %v319 = vld [vmem:[%s126 + $0x520] sm:$0xff]
        %v320 = vld [vmem:[%s126 + $0x528] sm:$0xff]
        %v321 = vld [vmem:[%s126 + $0x530] sm:$0xff]
        %v322 = vld [vmem:[%s126 + $0x538] sm:$0xff]
        %v323 = vld [vmem:[%s126 + $0x540] sm:$0xff]
        %v324 = vld [vmem:[%s126 + $0x548] sm:$0xff]
        %v325 = vld [vmem:[%s126 + $0x550] sm:$0xff]
        %v326 = vld [vmem:[%s126 + $0x558] sm:$0xff]
        %v327 = vld [vmem:[%s126 + $0x560] sm:$0xff]
        %v328 = vld [vmem:[%s126 + $0x568] sm:$0xff]
        %v329 = vld [vmem:[%s126 + $0x570] sm:$0xff]
        %v330 = vld [vmem:[%s126 + $0x578] sm:$0xff]
        %v331 = vld [vmem:[%s126 + $0x580] sm:$0xff]
        %v332 = vld [vmem:[%s126 + $0x588] sm:$0xff]
        %v333 = vld [vmem:[%s126 + $0x590] sm:$0xff]
        %v334 = vld [vmem:[%s126 + $0x598] sm:$0xff]
        %v335 = vld [vmem:[%s126 + $0x5a0] sm:$0xff]
        %v336 = vld [vmem:[%s126 + $0x5a8] sm:$0xff]
        %v337 = vld [vmem:[%s126 + $0x5b0] sm:$0xff]
        %v338 = vld [vmem:[%s126 + $0x5b8] sm:$0xff]
        %v339 = vld [vmem:[%s126 + $0x5c0] sm:$0xff]
        %v340 = vld [vmem:[%s126 + $0x5c8] sm:$0xff]
        %v341 = vld [vmem:[%s126 + $0x5d0] sm:$0xff]
        %v342 = vld [vmem:[%s126 + $0x5d8] sm:$0xff]
        %v343 = vld [vmem:[%s126 + $0x5e0] sm:$0xff]
        %v344 = vld [vmem:[%s126 + $0x5e8] sm:$0xff]
        %v345 = vld [vmem:[%s126 + $0x5f0] sm:$0xff]
        %v346 = vld [vmem:[%s126 + $0x5f8] sm:$0xff]
        %v347 = vld [vmem:[%s126 + $0x600] sm:$0xff]
        %v348 = vld [vmem:[%s126 + $0x608] sm:$0xff]
        %v349 = vld [vmem:[%s126 + $0x610] sm:$0xff]
        %v350 = vld [vmem:[%s126 + $0x618] sm:$0xff]
        %v351 = vld [vmem:[%s126 + $0x620] sm:$0xff]
        %v352 = vld [vmem:[%s126 + $0x628] sm:$0xff]
        %v353 = vld [vmem:[%s126 + $0x630] sm:$0xff]
        %v354 = vld [vmem:[%s126 + $0x638] sm:$0xff]
        %v355 = vld [vmem:[%s126 + $0x640] sm:$0xff]
        %v356 = vld [vmem:[%s126 + $0x648] sm:$0xff]
        %v357 = vld [vmem:[%s126 + $0x650] sm:$0xff]
        %v358 = vld [vmem:[%s126 + $0x658] sm:$0xff]
        %v359 = vld [vmem:[%s126 + $0x660] sm:$0xff]
        %v360 = vld [vmem:[%s126 + $0x668] sm:$0xff]
        %v361 = vld [vmem:[%s126 + $0x670] sm:$0xff]
        %v362 = vld [vmem:[%s126 + $0x678] sm:$0xff]
        %v363 = vld [vmem:[%s126 + $0x680] sm:$0xff]
        %v364 = vld [vmem:[%s126 + $0x688] sm:$0xff]
        %v365 = vld [vmem:[%s126 + $0x690] sm:$0xff]
        %v366 = vld [vmem:[%s126 + $0x698] sm:$0xff]
        %v367 = vld [vmem:[%s126 + $0x6a0] sm:$0xff]
        %v368 = vld [vmem:[%s126 + $0x6a8] sm:$0xff]
        %v369 = vld [vmem:[%s126 + $0x6b0] sm:$0xff]
        %v370 = vld [vmem:[%s126 + $0x6b8] sm:$0xff]
        %v371 = vld [vmem:[%s126 + $0x6c0] sm:$0xff]
        %v372 = vld [vmem:[%s126 + $0x6c8] sm:$0xff]
        %v373 = vld [vmem:[%s126 + $0x6d0] sm:$0xff]
        %v374 = vld [vmem:[%s126 + $0x6d8] sm:$0xff]
        %v375 = vld [vmem:[%s126 + $0x6e0] sm:$0xff]
        %v376 = vld [vmem:[%s126 + $0x6e8] sm:$0xff]
        %v377 = vld [vmem:[%s126 + $0x6f0] sm:$0xff]
        %v378 = vld [vmem:[%s126 + $0x6f8] sm:$0xff]
        %v379 = vld [vmem:[%s126 + $0x700] sm:$0xff]
        %v380 = vld [vmem:[%s126 + $0x708] sm:$0xff]
        %v381 = vld [vmem:[%s126 + $0x710] sm:$0xff]
        %v382 = vld [vmem:[%s126 + $0x718] sm:$0xff]
        %v383 = vld [vmem:[%s126 + $0x720] sm:$0xff]
        %v384 = vld [vmem:[%s126 + $0x728] sm:$0xff]
        %v385 = vld [vmem:[%s126 + $0x730] sm:$0xff]
        %v386 = vld [vmem:[%s126 + $0x738] sm:$0xff]
        %v387 = vld [vmem:[%s126 + $0x740] sm:$0xff]
        %v388 = vld [vmem:[%s126 + $0x748] sm:$0xff]
        %v389 = vld [vmem:[%s126 + $0x750] sm:$0xff]
        %v390 = vld [vmem:[%s126 + $0x758] sm:$0xff]
        %v391 = vld [vmem:[%s126 + $0x760] sm:$0xff]
        %v392 = vld [vmem:[%s126 + $0x768] sm:$0xff]
        %v393 = vld [vmem:[%s126 + $0x770] sm:$0xff]
        %v394 = vld [vmem:[%s126 + $0x778] sm:$0xff]
        %v395 = vld [vmem:[%s126 + $0x780] sm:$0xff]
        %v396 = vld [vmem:[%s126 + $0x788] sm:$0xff]
        %v397 = vld [vmem:[%s126 + $0x790] sm:$0xff]
        %v398 = vld [vmem:[%s126 + $0x798] sm:$0xff]
        %v399 = vld [vmem:[%s126 + $0x7a0] sm:$0xff]
        %v400 = vld [vmem:[%s126 + $0x7a8] sm:$0xff]
        %v401 = vld [vmem:[%s126 + $0x7b0] sm:$0xff]
        %v402 = vld [vmem:[%s126 + $0x7b8] sm:$0xff]
        %v403 = vld [vmem:[%s126 + $0x7c0] sm:$0xff]
        %v404 = vld [vmem:[%s126 + $0x7c8] sm:$0xff]
        %v405 = vld [vmem:[%s126 + $0x7d0] sm:$0xff]
        %v406 = vld [vmem:[%s126 + $0x7d8] sm:$0xff]
        %v407 = vld [vmem:[%s126 + $0x7e0] sm:$0xff]
        %v408 = vld [vmem:[%s126 + $0x7e8] sm:$0xff]
        %v409 = vld [vmem:[%s126 + $0x7f0] sm:$0xff]
        %v410 = vld [vmem:[%s126 + $0x7f8] sm:$0xff]
        %s411 = sld [smem:[#allocation3]]
        %v412 = vstv %s411
        %v413 = vmul.f32 %v155, %v412
        %v414 = vmul.f32 %v156, %v412
        %v415 = vmul.f32 %v157, %v412
        %v416 = vmul.f32 %v158, %v412
        %v417 = vmul.f32 %v159, %v412
        %v418 = vmul.f32 %v160, %v412
        %v419 = vmul.f32 %v161, %v412
        %v420 = vmul.f32 %v162, %v412
        %v421 = vmul.f32 %v163, %v412
        %v422 = vmul.f32 %v164, %v412
        %v423 = vmul.f32 %v165, %v412
        %v424 = vmul.f32 %v166, %v412
        %v425 = vmul.f32 %v167, %v412
        %v426 = vmul.f32 %v168, %v412
        %v427 = vmul.f32 %v169, %v412
        %v428 = vmul.f32 %v170, %v412
        %v429 = vmul.f32 %v171, %v412
        %v430 = vmul.f32 %v172, %v412
        %v431 = vmul.f32 %v173, %v412
        %v432 = vmul.f32 %v174, %v412
        %v433 = vmul.f32 %v175, %v412
        %v434 = vmul.f32 %v176, %v412
        %v435 = vmul.f32 %v177, %v412
        %v436 = vmul.f32 %v178, %v412
        %v437 = vmul.f32 %v179, %v412
        %v438 = vmul.f32 %v180, %v412
        %v439 = vmul.f32 %v181, %v412
        %v440 = vmul.f32 %v182, %v412
        %v441 = vmul.f32 %v183, %v412
        %v442 = vmul.f32 %v184, %v412
        %v443 = vmul.f32 %v185, %v412
        %v444 = vmul.f32 %v186, %v412
        %v445 = vmul.f32 %v187, %v412
        %v446 = vmul.f32 %v188, %v412
        %v447 = vmul.f32 %v189, %v412
        %v448 = vmul.f32 %v190, %v412
        %v449 = vmul.f32 %v191, %v412
        %v450 = vmul.f32 %v192, %v412
        %v451 = vmul.f32 %v193, %v412
        %v452 = vmul.f32 %v194, %v412
        %v453 = vmul.f32 %v195, %v412
        %v454 = vmul.f32 %v196, %v412
        %v455 = vmul.f32 %v197, %v412
        %v456 = vmul.f32 %v198, %v412
        %v457 = vmul.f32 %v199, %v412
        %v458 = vmul.f32 %v200, %v412
        %v459 = vmul.f32 %v201, %v412
        %v460 = vmul.f32 %v202, %v412
        %v461 = vmul.f32 %v203, %v412
        %v462 = vmul.f32 %v204, %v412
        %v463 = vmul.f32 %v205, %v412
        %v464 = vmul.f32 %v206, %v412
        %v465 = vmul.f32 %v207, %v412
        %v466 = vmul.f32 %v208, %v412
        %v467 = vmul.f32 %v209, %v412
        %v468 = vmul.f32 %v210, %v412
        %v469 = vmul.f32 %v211, %v412
        %v470 = vmul.f32 %v212, %v412
        %v471 = vmul.f32 %v213, %v412
        %v472 = vmul.f32 %v214, %v412
        %v473 = vmul.f32 %v215, %v412
        %v474 = vmul.f32 %v216, %v412
        %v475 = vmul.f32 %v217, %v412
        %v476 = vmul.f32 %v218, %v412
        %v477 = vmul.f32 %v219, %v412
        %v478 = vmul.f32 %v220, %v412
        %v479 = vmul.f32 %v221, %v412
        %v480 = vmul.f32 %v222, %v412
        %v481 = vmul.f32 %v223, %v412
        %v482 = vmul.f32 %v224, %v412
        %v483 = vmul.f32 %v225, %v412
        %v484 = vmul.f32 %v226, %v412
        %v485 = vmul.f32 %v227, %v412
        %v486 = vmul.f32 %v228, %v412
        %v487 = vmul.f32 %v229, %v412
        %v488 = vmul.f32 %v230, %v412
        %v489 = vmul.f32 %v231, %v412
        %v490 = vmul.f32 %v232, %v412
        %v491 = vmul.f32 %v233, %v412
        %v492 = vmul.f32 %v234, %v412
        %v493 = vmul.f32 %v235, %v412
        %v494 = vmul.f32 %v236, %v412
        %v495 = vmul.f32 %v237, %v412
        %v496 = vmul.f32 %v238, %v412
        %v497 = vmul.f32 %v239, %v412
        %v498 = vmul.f32 %v240, %v412
        %v499 = vmul.f32 %v241, %v412
        %v500 = vmul.f32 %v242, %v412
        %v501 = vmul.f32 %v243, %v412
        %v502 = vmul.f32 %v244, %v412
        %v503 = vmul.f32 %v245, %v412
        %v504 = vmul.f32 %v246, %v412
        %v505 = vmul.f32 %v247, %v412
        %v506 = vmul.f32 %v248, %v412
        %v507 = vmul.f32 %v249, %v412
        %v508 = vmul.f32 %v250, %v412
        %v509 = vmul.f32 %v251, %v412
        %v510 = vmul.f32 %v252, %v412
        %v511 = vmul.f32 %v253, %v412
        %v512 = vmul.f32 %v254, %v412
        %v513 = vmul.f32 %v255, %v412
        %v514 = vmul.f32 %v256, %v412
        %v515 = vmul.f32 %v257, %v412
        %v516 = vmul.f32 %v258, %v412
        %v517 = vmul.f32 %v259, %v412
        %v518 = vmul.f32 %v260, %v412
        %v519 = vmul.f32 %v261, %v412
        %v520 = vmul.f32 %v262, %v412
        %v521 = vmul.f32 %v263, %v412
        %v522 = vmul.f32 %v264, %v412
        %v523 = vmul.f32 %v265, %v412
        %v524 = vmul.f32 %v266, %v412
        %v525 = vmul.f32 %v267, %v412
        %v526 = vmul.f32 %v268, %v412
        %v527 = vmul.f32 %v269, %v412
        %v528 = vmul.f32 %v270, %v412
        %v529 = vmul.f32 %v271, %v412
        %v530 = vmul.f32 %v272, %v412
        %v531 = vmul.f32 %v273, %v412
        %v532 = vmul.f32 %v274, %v412
        %v533 = vmul.f32 %v275, %v412
        %v534 = vmul.f32 %v276, %v412
        %v535 = vmul.f32 %v277, %v412
        %v536 = vmul.f32 %v278, %v412
        %v537 = vmul.f32 %v279, %v412
        %v538 = vmul.f32 %v280, %v412
        %v539 = vmul.f32 %v281, %v412
        %v540 = vmul.f32 %v282, %v412
        %v541 = vmul.f32 %v283, %v412
        %v542 = vmul.f32 %v284, %v412
        %v543 = vmul.f32 %v285, %v412
        %v544 = vmul.f32 %v286, %v412
        %v545 = vmul.f32 %v287, %v412
        %v546 = vmul.f32 %v288, %v412
        %v547 = vmul.f32 %v289, %v412
        %v548 = vmul.f32 %v290, %v412
        %v549 = vmul.f32 %v291, %v412
        %v550 = vmul.f32 %v292, %v412
        %v551 = vmul.f32 %v293, %v412
        %v552 = vmul.f32 %v294, %v412
        %v553 = vmul.f32 %v295, %v412
        %v554 = vmul.f32 %v296, %v412
        %v555 = vmul.f32 %v297, %v412
        %v556 = vmul.f32 %v298, %v412
        %v557 = vmul.f32 %v299, %v412
        %v558 = vmul.f32 %v300, %v412
        %v559 = vmul.f32 %v301, %v412
        %v560 = vmul.f32 %v302, %v412
        %v561 = vmul.f32 %v303, %v412
        %v562 = vmul.f32 %v304, %v412
        %v563 = vmul.f32 %v305, %v412
        %v564 = vmul.f32 %v306, %v412
        %v565 = vmul.f32 %v307, %v412
        %v566 = vmul.f32 %v308, %v412
        %v567 = vmul.f32 %v309, %v412
        %v568 = vmul.f32 %v310, %v412
        %v569 = vmul.f32 %v311, %v412
        %v570 = vmul.f32 %v312, %v412
        %v571 = vmul.f32 %v313, %v412
        %v572 = vmul.f32 %v314, %v412
        %v573 = vmul.f32 %v315, %v412
        %v574 = vmul.f32 %v316, %v412
        %v575 = vmul.f32 %v317, %v412
        %v576 = vmul.f32 %v318, %v412
        %v577 = vmul.f32 %v319, %v412
        %v578 = vmul.f32 %v320, %v412
        %v579 = vmul.f32 %v321, %v412
        %v580 = vmul.f32 %v322, %v412
        %v581 = vmul.f32 %v323, %v412
        %v582 = vmul.f32 %v324, %v412
        %v583 = vmul.f32 %v325, %v412
        %v584 = vmul.f32 %v326, %v412
        %v585 = vmul.f32 %v327, %v412
        %v586 = vmul.f32 %v328, %v412
        %v587 = vmul.f32 %v329, %v412
        %v588 = vmul.f32 %v330, %v412
        %v589 = vmul.f32 %v331, %v412
        %v590 = vmul.f32 %v332, %v412
        %v591 = vmul.f32 %v333, %v412
        %v592 = vmul.f32 %v334, %v412
        %v593 = vmul.f32 %v335, %v412
        %v594 = vmul.f32 %v336, %v412
        %v595 = vmul.f32 %v337, %v412
        %v596 = vmul.f32 %v338, %v412
        %v597 = vmul.f32 %v339, %v412
        %v598 = vmul.f32 %v340, %v412
        %v599 = vmul.f32 %v341, %v412
        %v600 = vmul.f32 %v342, %v412
        %v601 = vmul.f32 %v343, %v412
        %v602 = vmul.f32 %v344, %v412
        %v603 = vmul.f32 %v345, %v412
        %v604 = vmul.f32 %v346, %v412
        %v605 = vmul.f32 %v347, %v412
        %v606 = vmul.f32 %v348, %v412
        %v607 = vmul.f32 %v349, %v412
        %v608 = vmul.f32 %v350, %v412
        %v609 = vmul.f32 %v351, %v412
        %v610 = vmul.f32 %v352, %v412
        %v611 = vmul.f32 %v353, %v412
        %v612 = vmul.f32 %v354, %v412
        %v613 = vmul.f32 %v355, %v412
        %v614 = vmul.f32 %v356, %v412
        %v615 = vmul.f32 %v357, %v412
        %v616 = vmul.f32 %v358, %v412
        %v617 = vmul.f32 %v359, %v412
        %v618 = vmul.f32 %v360, %v412
        %v619 = vmul.f32 %v361, %v412
        %v620 = vmul.f32 %v362, %v412
        %v621 = vmul.f32 %v363, %v412
        %v622 = vmul.f32 %v364, %v412
        %v623 = vmul.f32 %v365, %v412
        %v624 = vmul.f32 %v366, %v412
        %v625 = vmul.f32 %v367, %v412
        %v626 = vmul.f32 %v368, %v412
        %v627 = vmul.f32 %v369, %v412
        %v628 = vmul.f32 %v370, %v412
        %v629 = vmul.f32 %v371, %v412
        %v630 = vmul.f32 %v372, %v412
        %v631 = vmul.f32 %v373, %v412
        %v632 = vmul.f32 %v374, %v412
        %v633 = vmul.f32 %v375, %v412
        %v634 = vmul.f32 %v376, %v412
        %v635 = vmul.f32 %v377, %v412
        %v636 = vmul.f32 %v378, %v412
        %v637 = vmul.f32 %v379, %v412
        %v638 = vmul.f32 %v380, %v412
        %v639 = vmul.f32 %v381, %v412
        %v640 = vmul.f32 %v382, %v412
        %v641 = vmul.f32 %v383, %v412
        %v642 = vmul.f32 %v384, %v412
        %v643 = vmul.f32 %v385, %v412
        %v644 = vmul.f32 %v386, %v412
        %v645 = vmul.f32 %v387, %v412
        %v646 = vmul.f32 %v388, %v412
        %v647 = vmul.f32 %v389, %v412
        %v648 = vmul.f32 %v390, %v412
        %v649 = vmul.f32 %v391, %v412
        %v650 = vmul.f32 %v392, %v412
        %v651 = vmul.f32 %v393, %v412
        %v652 = vmul.f32 %v394, %v412
        %v653 = vmul.f32 %v395, %v412
        %v654 = vmul.f32 %v396, %v412
        %v655 = vmul.f32 %v397, %v412
        %v656 = vmul.f32 %v398, %v412
        %v657 = vmul.f32 %v399, %v412
        %v658 = vmul.f32 %v400, %v412
        %v659 = vmul.f32 %v401, %v412
        %v660 = vmul.f32 %v402, %v412
        %v661 = vmul.f32 %v403, %v412
        %v662 = vmul.f32 %v404, %v412
        %v663 = vmul.f32 %v405, %v412
        %v664 = vmul.f32 %v406, %v412
        %v665 = vmul.f32 %v407, %v412
        %v666 = vmul.f32 %v408, %v412
        %v667 = vmul.f32 %v409, %v412
        %v668 = vmul.f32 %v410, %v412
        %s669 = sld [smem:[#allocation4]]
        %v670 = vstv %s669
        %v671 = vadd.f32 %v413, %v670
        %v672 = vadd.f32 %v414, %v670
        %v673 = vadd.f32 %v415, %v670
        %v674 = vadd.f32 %v416, %v670
        %v675 = vadd.f32 %v417, %v670
        %v676 = vadd.f32 %v418, %v670
        %v677 = vadd.f32 %v419, %v670
        %v678 = vadd.f32 %v420, %v670
        %v679 = vadd.f32 %v421, %v670
        %v680 = vadd.f32 %v422, %v670
        %v681 = vadd.f32 %v423, %v670
        %v682 = vadd.f32 %v424, %v670
        %v683 = vadd.f32 %v425, %v670
        %v684 = vadd.f32 %v426, %v670
        %v685 = vadd.f32 %v427, %v670
        %v686 = vadd.f32 %v428, %v670
        %v687 = vadd.f32 %v429, %v670
        %v688 = vadd.f32 %v430, %v670
        %v689 = vadd.f32 %v431, %v670
        %v690 = vadd.f32 %v432, %v670
        %v691 = vadd.f32 %v433, %v670
        %v692 = vadd.f32 %v434, %v670
        %v693 = vadd.f32 %v435, %v670
        %v694 = vadd.f32 %v436, %v670
        %v695 = vadd.f32 %v437, %v670
        %v696 = vadd.f32 %v438, %v670
        %v697 = vadd.f32 %v439, %v670
        %v698 = vadd.f32 %v440, %v670
        %v699 = vadd.f32 %v441, %v670
        %v700 = vadd.f32 %v442, %v670
        %v701 = vadd.f32 %v443, %v670
        %v702 = vadd.f32 %v444, %v670
        %v703 = vadd.f32 %v445, %v670
        %v704 = vadd.f32 %v446, %v670
        %v705 = vadd.f32 %v447, %v670
        %v706 = vadd.f32 %v448, %v670
        %v707 = vadd.f32 %v449, %v670
        %v708 = vadd.f32 %v450, %v670
        %v709 = vadd.f32 %v451, %v670
        %v710 = vadd.f32 %v452, %v670
        %v711 = vadd.f32 %v453, %v670
        %v712 = vadd.f32 %v454, %v670
        %v713 = vadd.f32 %v455, %v670
        %v714 = vadd.f32 %v456, %v670
        %v715 = vadd.f32 %v457, %v670
        %v716 = vadd.f32 %v458, %v670
        %v717 = vadd.f32 %v459, %v670
        %v718 = vadd.f32 %v460, %v670
        %v719 = vadd.f32 %v461, %v670
        %v720 = vadd.f32 %v462, %v670
        %v721 = vadd.f32 %v463, %v670
        %v722 = vadd.f32 %v464, %v670
        %v723 = vadd.f32 %v465, %v670
        %v724 = vadd.f32 %v466, %v670
        %v725 = vadd.f32 %v467, %v670
        %v726 = vadd.f32 %v468, %v670
        %v727 = vadd.f32 %v469, %v670
        %v728 = vadd.f32 %v470, %v670
        %v729 = vadd.f32 %v471, %v670
        %v730 = vadd.f32 %v472, %v670
        %v731 = vadd.f32 %v473, %v670
        %v732 = vadd.f32 %v474, %v670
        %v733 = vadd.f32 %v475, %v670
        %v734 = vadd.f32 %v476, %v670
        %v735 = vadd.f32 %v477, %v670
        %v736 = vadd.f32 %v478, %v670
        %v737 = vadd.f32 %v479, %v670
        %v738 = vadd.f32 %v480, %v670
        %v739 = vadd.f32 %v481, %v670
        %v740 = vadd.f32 %v482, %v670
        %v741 = vadd.f32 %v483, %v670
        %v742 = vadd.f32 %v484, %v670
        %v743 = vadd.f32 %v485, %v670
        %v744 = vadd.f32 %v486, %v670
        %v745 = vadd.f32 %v487, %v670
        %v746 = vadd.f32 %v488, %v670
        %v747 = vadd.f32 %v489, %v670
        %v748 = vadd.f32 %v490, %v670
        %v749 = vadd.f32 %v491, %v670
        %v750 = vadd.f32 %v492, %v670
        %v751 = vadd.f32 %v493, %v670
        %v752 = vadd.f32 %v494, %v670
        %v753 = vadd.f32 %v495, %v670
        %v754 = vadd.f32 %v496, %v670
        %v755 = vadd.f32 %v497, %v670
        %v756 = vadd.f32 %v498, %v670
        %v757 = vadd.f32 %v499, %v670
        %v758 = vadd.f32 %v500, %v670
        %v759 = vadd.f32 %v501, %v670
        %v760 = vadd.f32 %v502, %v670
        %v761 = vadd.f32 %v503, %v670
        %v762 = vadd.f32 %v504, %v670
        %v763 = vadd.f32 %v505, %v670
        %v764 = vadd.f32 %v506, %v670
        %v765 = vadd.f32 %v507, %v670
        %v766 = vadd.f32 %v508, %v670
        %v767 = vadd.f32 %v509, %v670
        %v768 = vadd.f32 %v510, %v670
        %v769 = vadd.f32 %v511, %v670
        %v770 = vadd.f32 %v512, %v670
        %v771 = vadd.f32 %v513, %v670
        %v772 = vadd.f32 %v514, %v670
        %v773 = vadd.f32 %v515, %v670
        %v774 = vadd.f32 %v516, %v670
        %v775 = vadd.f32 %v517, %v670
        %v776 = vadd.f32 %v518, %v670
        %v777 = vadd.f32 %v519, %v670
        %v778 = vadd.f32 %v520, %v670
        %v779 = vadd.f32 %v521, %v670
        %v780 = vadd.f32 %v522, %v670
        %v781 = vadd.f32 %v523, %v670
        %v782 = vadd.f32 %v524, %v670
        %v783 = vadd.f32 %v525, %v670
        %v784 = vadd.f32 %v526, %v670
        %v785 = vadd.f32 %v527, %v670
        %v786 = vadd.f32 %v528, %v670
        %v787 = vadd.f32 %v529, %v670
        %v788 = vadd.f32 %v530, %v670
        %v789 = vadd.f32 %v531, %v670
        %v790 = vadd.f32 %v532, %v670
        %v791 = vadd.f32 %v533, %v670
        %v792 = vadd.f32 %v534, %v670
        %v793 = vadd.f32 %v535, %v670
        %v794 = vadd.f32 %v536, %v670
        %v795 = vadd.f32 %v537, %v670
        %v796 = vadd.f32 %v538, %v670
        %v797 = vadd.f32 %v539, %v670
        %v798 = vadd.f32 %v540, %v670
        %v799 = vadd.f32 %v541, %v670
        %v800 = vadd.f32 %v542, %v670
        %v801 = vadd.f32 %v543, %v670
        %v802 = vadd.f32 %v544, %v670
        %v803 = vadd.f32 %v545, %v670
        %v804 = vadd.f32 %v546, %v670
        %v805 = vadd.f32 %v547, %v670
        %v806 = vadd.f32 %v548, %v670
        %v807 = vadd.f32 %v549, %v670
        %v808 = vadd.f32 %v550, %v670
        %v809 = vadd.f32 %v551, %v670
        %v810 = vadd.f32 %v552, %v670
        %v811 = vadd.f32 %v553, %v670
        %v812 = vadd.f32 %v554, %v670
        %v813 = vadd.f32 %v555, %v670
        %v814 = vadd.f32 %v556, %v670
        %v815 = vadd.f32 %v557, %v670
        %v816 = vadd.f32 %v558, %v670
        %v817 = vadd.f32 %v559, %v670
        %v818 = vadd.f32 %v560, %v670
        %v819 = vadd.f32 %v561, %v670
        %v820 = vadd.f32 %v562, %v670
        %v821 = vadd.f32 %v563, %v670
        %v822 = vadd.f32 %v564, %v670
        %v823 = vadd.f32 %v565, %v670
        %v824 = vadd.f32 %v566, %v670
        %v825 = vadd.f32 %v567, %v670
        %v826 = vadd.f32 %v568, %v670
        %v827 = vadd.f32 %v569, %v670
        %v828 = vadd.f32 %v570, %v670
        %v829 = vadd.f32 %v571, %v670
        %v830 = vadd.f32 %v572, %v670
        %v831 = vadd.f32 %v573, %v670
        %v832 = vadd.f32 %v574, %v670
        %v833 = vadd.f32 %v575, %v670
        %v834 = vadd.f32 %v576, %v670
        %v835 = vadd.f32 %v577, %v670
        %v836 = vadd.f32 %v578, %v670
        %v837 = vadd.f32 %v579, %v670
        %v838 = vadd.f32 %v580, %v670
        %v839 = vadd.f32 %v581, %v670
        %v840 = vadd.f32 %v582, %v670
        %v841 = vadd.f32 %v583, %v670
        %v842 = vadd.f32 %v584, %v670
        %v843 = vadd.f32 %v585, %v670
        %v844 = vadd.f32 %v586, %v670
        %v845 = vadd.f32 %v587, %v670
        %v846 = vadd.f32 %v588, %v670
        %v847 = vadd.f32 %v589, %v670
        %v848 = vadd.f32 %v590, %v670
        %v849 = vadd.f32 %v591, %v670
        %v850 = vadd.f32 %v592, %v670
        %v851 = vadd.f32 %v593, %v670
        %v852 = vadd.f32 %v594, %v670
        %v853 = vadd.f32 %v595, %v670
        %v854 = vadd.f32 %v596, %v670
        %v855 = vadd.f32 %v597, %v670
        %v856 = vadd.f32 %v598, %v670
        %v857 = vadd.f32 %v599, %v670
        %v858 = vadd.f32 %v600, %v670
        %v859 = vadd.f32 %v601, %v670
        %v860 = vadd.f32 %v602, %v670
        %v861 = vadd.f32 %v603, %v670
        %v862 = vadd.f32 %v604, %v670
        %v863 = vadd.f32 %v605, %v670
        %v864 = vadd.f32 %v606, %v670
        %v865 = vadd.f32 %v607, %v670
        %v866 = vadd.f32 %v608, %v670
        %v867 = vadd.f32 %v609, %v670
        %v868 = vadd.f32 %v610, %v670
        %v869 = vadd.f32 %v611, %v670
        %v870 = vadd.f32 %v612, %v670
        %v871 = vadd.f32 %v613, %v670
        %v872 = vadd.f32 %v614, %v670
        %v873 = vadd.f32 %v615, %v670
        %v874 = vadd.f32 %v616, %v670
        %v875 = vadd.f32 %v617, %v670
        %v876 = vadd.f32 %v618, %v670
        %v877 = vadd.f32 %v619, %v670
        %v878 = vadd.f32 %v620, %v670
        %v879 = vadd.f32 %v621, %v670
        %v880 = vadd.f32 %v622, %v670
        %v881 = vadd.f32 %v623, %v670
        %v882 = vadd.f32 %v624, %v670
        %v883 = vadd.f32 %v625, %v670
        %v884 = vadd.f32 %v626, %v670
        %v885 = vadd.f32 %v627, %v670
        %v886 = vadd.f32 %v628, %v670
        %v887 = vadd.f32 %v629, %v670
        %v888 = vadd.f32 %v630, %v670
        %v889 = vadd.f32 %v631, %v670
        %v890 = vadd.f32 %v632, %v670
        %v891 = vadd.f32 %v633, %v670
        %v892 = vadd.f32 %v634, %v670
        %v893 = vadd.f32 %v635, %v670
        %v894 = vadd.f32 %v636, %v670
        %v895 = vadd.f32 %v637, %v670
        %v896 = vadd.f32 %v638, %v670
        %v897 = vadd.f32 %v639, %v670
        %v898 = vadd.f32 %v640, %v670
        %v899 = vadd.f32 %v641, %v670
        %v900 = vadd.f32 %v642, %v670
        %v901 = vadd.f32 %v643, %v670
        %v902 = vadd.f32 %v644, %v670
        %v903 = vadd.f32 %v645, %v670
        %v904 = vadd.f32 %v646, %v670
        %v905 = vadd.f32 %v647, %v670
        %v906 = vadd.f32 %v648, %v670
        %v907 = vadd.f32 %v649, %v670
        %v908 = vadd.f32 %v650, %v670
        %v909 = vadd.f32 %v651, %v670
        %v910 = vadd.f32 %v652, %v670
        %v911 = vadd.f32 %v653, %v670
        %v912 = vadd.f32 %v654, %v670
        %v913 = vadd.f32 %v655, %v670
        %v914 = vadd.f32 %v656, %v670
        %v915 = vadd.f32 %v657, %v670
        %v916 = vadd.f32 %v658, %v670
        %v917 = vadd.f32 %v659, %v670
        %v918 = vadd.f32 %v660, %v670
        %v919 = vadd.f32 %v661, %v670
        %v920 = vadd.f32 %v662, %v670
        %v921 = vadd.f32 %v663, %v670
        %v922 = vadd.f32 %v664, %v670
        %v923 = vadd.f32 %v665, %v670
        %v924 = vadd.f32 %v666, %v670
        %v925 = vadd.f32 %v667, %v670
        %v926 = vadd.f32 %v668, %v670
        %927 = vst [vmem:[%s144] sm:$0xff] %v671
        %928 = vst [vmem:[%s144 + $0x8] sm:$0xff] %v672
        %929 = vst [vmem:[%s144 + $0x10] sm:$0xff] %v673
        %930 = vst [vmem:[%s144 + $0x18] sm:$0xff] %v674
        %931 = vst [vmem:[%s144 + $0x20] sm:$0xff] %v675
        %932 = vst [vmem:[%s144 + $0x28] sm:$0xff] %v676
        %933 = vst [vmem:[%s144 + $0x30] sm:$0xff] %v677
        %934 = vst [vmem:[%s144 + $0x38] sm:$0xff] %v678
        %935 = vst [vmem:[%s144 + $0x40] sm:$0xff] %v679
        %936 = vst [vmem:[%s144 + $0x48] sm:$0xff] %v680
        %937 = vst [vmem:[%s144 + $0x50] sm:$0xff] %v681
        %938 = vst [vmem:[%s144 + $0x58] sm:$0xff] %v682
        %939 = vst [vmem:[%s144 + $0x60] sm:$0xff] %v683
        %940 = vst [vmem:[%s144 + $0x68] sm:$0xff] %v684
        %941 = vst [vmem:[%s144 + $0x70] sm:$0xff] %v685
        %942 = vst [vmem:[%s144 + $0x78] sm:$0xff] %v686
        %943 = vst [vmem:[%s144 + $0x80] sm:$0xff] %v687
        %944 = vst [vmem:[%s144 + $0x88] sm:$0xff] %v688
        %945 = vst [vmem:[%s144 + $0x90] sm:$0xff] %v689
        %946 = vst [vmem:[%s144 + $0x98] sm:$0xff] %v690
        %947 = vst [vmem:[%s144 + $0xa0] sm:$0xff] %v691
        %948 = vst [vmem:[%s144 + $0xa8] sm:$0xff] %v692
        %949 = vst [vmem:[%s144 + $0xb0] sm:$0xff] %v693
        %950 = vst [vmem:[%s144 + $0xb8] sm:$0xff] %v694
        %951 = vst [vmem:[%s144 + $0xc0] sm:$0xff] %v695
        %952 = vst [vmem:[%s144 + $0xc8] sm:$0xff] %v696
        %953 = vst [vmem:[%s144 + $0xd0] sm:$0xff] %v697
        %954 = vst [vmem:[%s144 + $0xd8] sm:$0xff] %v698
        %955 = vst [vmem:[%s144 + $0xe0] sm:$0xff] %v699
        %956 = vst [vmem:[%s144 + $0xe8] sm:$0xff] %v700
        %957 = vst [vmem:[%s144 + $0xf0] sm:$0xff] %v701
        %958 = vst [vmem:[%s144 + $0xf8] sm:$0xff] %v702
        %959 = vst [vmem:[%s144 + $0x100] sm:$0xff] %v703
        %960 = vst [vmem:[%s144 + $0x108] sm:$0xff] %v704
        %961 = vst [vmem:[%s144 + $0x110] sm:$0xff] %v705
        %962 = vst [vmem:[%s144 + $0x118] sm:$0xff] %v706
        %963 = vst [vmem:[%s144 + $0x120] sm:$0xff] %v707
        %964 = vst [vmem:[%s144 + $0x128] sm:$0xff] %v708
        %965 = vst [vmem:[%s144 + $0x130] sm:$0xff] %v709
        %966 = vst [vmem:[%s144 + $0x138] sm:$0xff] %v710
        %967 = vst [vmem:[%s144 + $0x140] sm:$0xff] %v711
        %968 = vst [vmem:[%s144 + $0x148] sm:$0xff] %v712
        %969 = vst [vmem:[%s144 + $0x150] sm:$0xff] %v713
        %970 = vst [vmem:[%s144 + $0x158] sm:$0xff] %v714
        %971 = vst [vmem:[%s144 + $0x160] sm:$0xff] %v715
        %972 = vst [vmem:[%s144 + $0x168] sm:$0xff] %v716
        %973 = vst [vmem:[%s144 + $0x170] sm:$0xff] %v717
        %974 = vst [vmem:[%s144 + $0x178] sm:$0xff] %v718
        %975 = vst [vmem:[%s144 + $0x180] sm:$0xff] %v719
        %976 = vst [vmem:[%s144 + $0x188] sm:$0xff] %v720
        %977 = vst [vmem:[%s144 + $0x190] sm:$0xff] %v721
        %978 = vst [vmem:[%s144 + $0x198] sm:$0xff] %v722
        %979 = vst [vmem:[%s144 + $0x1a0] sm:$0xff] %v723
        %980 = vst [vmem:[%s144 + $0x1a8] sm:$0xff] %v724
        %981 = vst [vmem:[%s144 + $0x1b0] sm:$0xff] %v725
        %982 = vst [vmem:[%s144 + $0x1b8] sm:$0xff] %v726
        %983 = vst [vmem:[%s144 + $0x1c0] sm:$0xff] %v727
        %984 = vst [vmem:[%s144 + $0x1c8] sm:$0xff] %v728
        %985 = vst [vmem:[%s144 + $0x1d0] sm:$0xff] %v729
        %986 = vst [vmem:[%s144 + $0x1d8] sm:$0xff] %v730
        %987 = vst [vmem:[%s144 + $0x1e0] sm:$0xff] %v731
        %988 = vst [vmem:[%s144 + $0x1e8] sm:$0xff] %v732
        %989 = vst [vmem:[%s144 + $0x1f0] sm:$0xff] %v733
        %990 = vst [vmem:[%s144 + $0x1f8] sm:$0xff] %v734
        %991 = vst [vmem:[%s144 + $0x200] sm:$0xff] %v735
        %992 = vst [vmem:[%s144 + $0x208] sm:$0xff] %v736
        %993 = vst [vmem:[%s144 + $0x210] sm:$0xff] %v737
        %994 = vst [vmem:[%s144 + $0x218] sm:$0xff] %v738
        %995 = vst [vmem:[%s144 + $0x220] sm:$0xff] %v739
        %996 = vst [vmem:[%s144 + $0x228] sm:$0xff] %v740
        %997 = vst [vmem:[%s144 + $0x230] sm:$0xff] %v741
        %998 = vst [vmem:[%s144 + $0x238] sm:$0xff] %v742
        %999 = vst [vmem:[%s144 + $0x240] sm:$0xff] %v743
        %1000 = vst [vmem:[%s144 + $0x248] sm:$0xff] %v744
        %1001 = vst [vmem:[%s144 + $0x250] sm:$0xff] %v745
        %1002 = vst [vmem:[%s144 + $0x258] sm:$0xff] %v746
        %1003 = vst [vmem:[%s144 + $0x260] sm:$0xff] %v747
        %1004 = vst [vmem:[%s144 + $0x268] sm:$0xff] %v748
        %1005 = vst [vmem:[%s144 + $0x270] sm:$0xff] %v749
        %1006 = vst [vmem:[%s144 + $0x278] sm:$0xff] %v750
        %1007 = vst [vmem:[%s144 + $0x280] sm:$0xff] %v751
        %1008 = vst [vmem:[%s144 + $0x288] sm:$0xff] %v752
        %1009 = vst [vmem:[%s144 + $0x290] sm:$0xff] %v753
        %1010 = vst [vmem:[%s144 + $0x298] sm:$0xff] %v754
        %1011 = vst [vmem:[%s144 + $0x2a0] sm:$0xff] %v755
        %1012 = vst [vmem:[%s144 + $0x2a8] sm:$0xff] %v756
        %1013 = vst [vmem:[%s144 + $0x2b0] sm:$0xff] %v757
        %1014 = vst [vmem:[%s144 + $0x2b8] sm:$0xff] %v758
        %1015 = vst [vmem:[%s144 + $0x2c0] sm:$0xff] %v759
        %1016 = vst [vmem:[%s144 + $0x2c8] sm:$0xff] %v760
        %1017 = vst [vmem:[%s144 + $0x2d0] sm:$0xff] %v761
        %1018 = vst [vmem:[%s144 + $0x2d8] sm:$0xff] %v762
        %1019 = vst [vmem:[%s144 + $0x2e0] sm:$0xff] %v763
        %1020 = vst [vmem:[%s144 + $0x2e8] sm:$0xff] %v764
        %1021 = vst [vmem:[%s144 + $0x2f0] sm:$0xff] %v765
        %1022 = vst [vmem:[%s144 + $0x2f8] sm:$0xff] %v766
        %1023 = vst [vmem:[%s144 + $0x300] sm:$0xff] %v767
        %1024 = vst [vmem:[%s144 + $0x308] sm:$0xff] %v768
        %1025 = vst [vmem:[%s144 + $0x310] sm:$0xff] %v769
        %1026 = vst [vmem:[%s144 + $0x318] sm:$0xff] %v770
        %1027 = vst [vmem:[%s144 + $0x320] sm:$0xff] %v771
        %1028 = vst [vmem:[%s144 + $0x328] sm:$0xff] %v772
        %1029 = vst [vmem:[%s144 + $0x330] sm:$0xff] %v773
        %1030 = vst [vmem:[%s144 + $0x338] sm:$0xff] %v774
        %1031 = vst [vmem:[%s144 + $0x340] sm:$0xff] %v775
        %1032 = vst [vmem:[%s144 + $0x348] sm:$0xff] %v776
        %1033 = vst [vmem:[%s144 + $0x350] sm:$0xff] %v777
        %1034 = vst [vmem:[%s144 + $0x358] sm:$0xff] %v778
        %1035 = vst [vmem:[%s144 + $0x360] sm:$0xff] %v779
        %1036 = vst [vmem:[%s144 + $0x368] sm:$0xff] %v780
        %1037 = vst [vmem:[%s144 + $0x370] sm:$0xff] %v781
        %1038 = vst [vmem:[%s144 + $0x378] sm:$0xff] %v782
        %1039 = vst [vmem:[%s144 + $0x380] sm:$0xff] %v783
        %1040 = vst [vmem:[%s144 + $0x388] sm:$0xff] %v784
        %1041 = vst [vmem:[%s144 + $0x390] sm:$0xff] %v785
        %1042 = vst [vmem:[%s144 + $0x398] sm:$0xff] %v786
        %1043 = vst [vmem:[%s144 + $0x3a0] sm:$0xff] %v787
        %1044 = vst [vmem:[%s144 + $0x3a8] sm:$0xff] %v788
        %1045 = vst [vmem:[%s144 + $0x3b0] sm:$0xff] %v789
        %1046 = vst [vmem:[%s144 + $0x3b8] sm:$0xff] %v790
        %1047 = vst [vmem:[%s144 + $0x3c0] sm:$0xff] %v791
        %1048 = vst [vmem:[%s144 + $0x3c8] sm:$0xff] %v792
        %1049 = vst [vmem:[%s144 + $0x3d0] sm:$0xff] %v793
        %1050 = vst [vmem:[%s144 + $0x3d8] sm:$0xff] %v794
        %1051 = vst [vmem:[%s144 + $0x3e0] sm:$0xff] %v795
        %1052 = vst [vmem:[%s144 + $0x3e8] sm:$0xff] %v796
        %1053 = vst [vmem:[%s144 + $0x3f0] sm:$0xff] %v797
        %1054 = vst [vmem:[%s144 + $0x3f8] sm:$0xff] %v798
        %1055 = vst [vmem:[%s144 + $0x400] sm:$0xff] %v799
        %1056 = vst [vmem:[%s144 + $0x408] sm:$0xff] %v800
        %1057 = vst [vmem:[%s144 + $0x410] sm:$0xff] %v801
        %1058 = vst [vmem:[%s144 + $0x418] sm:$0xff] %v802
        %1059 = vst [vmem:[%s144 + $0x420] sm:$0xff] %v803
        %1060 = vst [vmem:[%s144 + $0x428] sm:$0xff] %v804
        %1061 = vst [vmem:[%s144 + $0x430] sm:$0xff] %v805
        %1062 = vst [vmem:[%s144 + $0x438] sm:$0xff] %v806
        %1063 = vst [vmem:[%s144 + $0x440] sm:$0xff] %v807
        %1064 = vst [vmem:[%s144 + $0x448] sm:$0xff] %v808
        %1065 = vst [vmem:[%s144 + $0x450] sm:$0xff] %v809
        %1066 = vst [vmem:[%s144 + $0x458] sm:$0xff] %v810
        %1067 = vst [vmem:[%s144 + $0x460] sm:$0xff] %v811
        %1068 = vst [vmem:[%s144 + $0x468] sm:$0xff] %v812
        %1069 = vst [vmem:[%s144 + $0x470] sm:$0xff] %v813
        %1070 = vst [vmem:[%s144 + $0x478] sm:$0xff] %v814
        %1071 = vst [vmem:[%s144 + $0x480] sm:$0xff] %v815
        %1072 = vst [vmem:[%s144 + $0x488] sm:$0xff] %v816
        %1073 = vst [vmem:[%s144 + $0x490] sm:$0xff] %v817
        %1074 = vst [vmem:[%s144 + $0x498] sm:$0xff] %v818
        %1075 = vst [vmem:[%s144 + $0x4a0] sm:$0xff] %v819
        %1076 = vst [vmem:[%s144 + $0x4a8] sm:$0xff] %v820
        %1077 = vst [vmem:[%s144 + $0x4b0] sm:$0xff] %v821
        %1078 = vst [vmem:[%s144 + $0x4b8] sm:$0xff] %v822
        %1079 = vst [vmem:[%s144 + $0x4c0] sm:$0xff] %v823
        %1080 = vst [vmem:[%s144 + $0x4c8] sm:$0xff] %v824
        %1081 = vst [vmem:[%s144 + $0x4d0] sm:$0xff] %v825
        %1082 = vst [vmem:[%s144 + $0x4d8] sm:$0xff] %v826
        %1083 = vst [vmem:[%s144 + $0x4e0] sm:$0xff] %v827
        %1084 = vst [vmem:[%s144 + $0x4e8] sm:$0xff] %v828
        %1085 = vst [vmem:[%s144 + $0x4f0] sm:$0xff] %v829
        %1086 = vst [vmem:[%s144 + $0x4f8] sm:$0xff] %v830
        %1087 = vst [vmem:[%s144 + $0x500] sm:$0xff] %v831
        %1088 = vst [vmem:[%s144 + $0x508] sm:$0xff] %v832
        %1089 = vst [vmem:[%s144 + $0x510] sm:$0xff] %v833
        %1090 = vst [vmem:[%s144 + $0x518] sm:$0xff] %v834
        %1091 = vst [vmem:[%s144 + $0x520] sm:$0xff] %v835
        %1092 = vst [vmem:[%s144 + $0x528] sm:$0xff] %v836
        %1093 = vst [vmem:[%s144 + $0x530] sm:$0xff] %v837
        %1094 = vst [vmem:[%s144 + $0x538] sm:$0xff] %v838
        %1095 = vst [vmem:[%s144 + $0x540] sm:$0xff] %v839
        %1096 = vst [vmem:[%s144 + $0x548] sm:$0xff] %v840
        %1097 = vst [vmem:[%s144 + $0x550] sm:$0xff] %v841
        %1098 = vst [vmem:[%s144 + $0x558] sm:$0xff] %v842
        %1099 = vst [vmem:[%s144 + $0x560] sm:$0xff] %v843
        %1100 = vst [vmem:[%s144 + $0x568] sm:$0xff] %v844
        %1101 = vst [vmem:[%s144 + $0x570] sm:$0xff] %v845
        %1102 = vst [vmem:[%s144 + $0x578] sm:$0xff] %v846
        %1103 = vst [vmem:[%s144 + $0x580] sm:$0xff] %v847
        %1104 = vst [vmem:[%s144 + $0x588] sm:$0xff] %v848
        %1105 = vst [vmem:[%s144 + $0x590] sm:$0xff] %v849
        %1106 = vst [vmem:[%s144 + $0x598] sm:$0xff] %v850
        %1107 = vst [vmem:[%s144 + $0x5a0] sm:$0xff] %v851
        %1108 = vst [vmem:[%s144 + $0x5a8] sm:$0xff] %v852
        %1109 = vst [vmem:[%s144 + $0x5b0] sm:$0xff] %v853
        %1110 = vst [vmem:[%s144 + $0x5b8] sm:$0xff] %v854
        %1111 = vst [vmem:[%s144 + $0x5c0] sm:$0xff] %v855
        %1112 = vst [vmem:[%s144 + $0x5c8] sm:$0xff] %v856
        %1113 = vst [vmem:[%s144 + $0x5d0] sm:$0xff] %v857
        %1114 = vst [vmem:[%s144 + $0x5d8] sm:$0xff] %v858
        %1115 = vst [vmem:[%s144 + $0x5e0] sm:$0xff] %v859
        %1116 = vst [vmem:[%s144 + $0x5e8] sm:$0xff] %v860
        %1117 = vst [vmem:[%s144 + $0x5f0] sm:$0xff] %v861
        %1118 = vst [vmem:[%s144 + $0x5f8] sm:$0xff] %v862
        %1119 = vst [vmem:[%s144 + $0x600] sm:$0xff] %v863
        %1120 = vst [vmem:[%s144 + $0x608] sm:$0xff] %v864
        %1121 = vst [vmem:[%s144 + $0x610] sm:$0xff] %v865
        %1122 = vst [vmem:[%s144 + $0x618] sm:$0xff] %v866
        %1123 = vst [vmem:[%s144 + $0x620] sm:$0xff] %v867
        %1124 = vst [vmem:[%s144 + $0x628] sm:$0xff] %v868
        %1125 = vst [vmem:[%s144 + $0x630] sm:$0xff] %v869
        %1126 = vst [vmem:[%s144 + $0x638] sm:$0xff] %v870
        %1127 = vst [vmem:[%s144 + $0x640] sm:$0xff] %v871
        %1128 = vst [vmem:[%s144 + $0x648] sm:$0xff] %v872
        %1129 = vst [vmem:[%s144 + $0x650] sm:$0xff] %v873
        %1130 = vst [vmem:[%s144 + $0x658] sm:$0xff] %v874
        %1131 = vst [vmem:[%s144 + $0x660] sm:$0xff] %v875
        %1132 = vst [vmem:[%s144 + $0x668] sm:$0xff] %v876
        %1133 = vst [vmem:[%s144 + $0x670] sm:$0xff] %v877
        %1134 = vst [vmem:[%s144 + $0x678] sm:$0xff] %v878
        %1135 = vst [vmem:[%s144 + $0x680] sm:$0xff] %v879
        %1136 = vst [vmem:[%s144 + $0x688] sm:$0xff] %v880
        %1137 = vst [vmem:[%s144 + $0x690] sm:$0xff] %v881
        %1138 = vst [vmem:[%s144 + $0x698] sm:$0xff] %v882
        %1139 = vst [vmem:[%s144 + $0x6a0] sm:$0xff] %v883
        %1140 = vst [vmem:[%s144 + $0x6a8] sm:$0xff] %v884
        %1141 = vst [vmem:[%s144 + $0x6b0] sm:$0xff] %v885
        %1142 = vst [vmem:[%s144 + $0x6b8] sm:$0xff] %v886
        %1143 = vst [vmem:[%s144 + $0x6c0] sm:$0xff] %v887
        %1144 = vst [vmem:[%s144 + $0x6c8] sm:$0xff] %v888
        %1145 = vst [vmem:[%s144 + $0x6d0] sm:$0xff] %v889
        %1146 = vst [vmem:[%s144 + $0x6d8] sm:$0xff] %v890
        %1147 = vst [vmem:[%s144 + $0x6e0] sm:$0xff] %v891
        %1148 = vst [vmem:[%s144 + $0x6e8] sm:$0xff] %v892
        %1149 = vst [vmem:[%s144 + $0x6f0] sm:$0xff] %v893
        %1150 = vst [vmem:[%s144 + $0x6f8] sm:$0xff] %v894
        %1151 = vst [vmem:[%s144 + $0x700] sm:$0xff] %v895
        %1152 = vst [vmem:[%s144 + $0x708] sm:$0xff] %v896
        %1153 = vst [vmem:[%s144 + $0x710] sm:$0xff] %v897
        %1154 = vst [vmem:[%s144 + $0x718] sm:$0xff] %v898
        %1155 = vst [vmem:[%s144 + $0x720] sm:$0xff] %v899
        %1156 = vst [vmem:[%s144 + $0x728] sm:$0xff] %v900
        %1157 = vst [vmem:[%s144 + $0x730] sm:$0xff] %v901
        %1158 = vst [vmem:[%s144 + $0x738] sm:$0xff] %v902
        %1159 = vst [vmem:[%s144 + $0x740] sm:$0xff] %v903
        %1160 = vst [vmem:[%s144 + $0x748] sm:$0xff] %v904
        %1161 = vst [vmem:[%s144 + $0x750] sm:$0xff] %v905
        %1162 = vst [vmem:[%s144 + $0x758] sm:$0xff] %v906
        %1163 = vst [vmem:[%s144 + $0x760] sm:$0xff] %v907
        %1164 = vst [vmem:[%s144 + $0x768] sm:$0xff] %v908
        %1165 = vst [vmem:[%s144 + $0x770] sm:$0xff] %v909
        %1166 = vst [vmem:[%s144 + $0x778] sm:$0xff] %v910
        %1167 = vst [vmem:[%s144 + $0x780] sm:$0xff] %v911
        %1168 = vst [vmem:[%s144 + $0x788] sm:$0xff] %v912
        %1169 = vst [vmem:[%s144 + $0x790] sm:$0xff] %v913
        %1170 = vst [vmem:[%s144 + $0x798] sm:$0xff] %v914
        %1171 = vst [vmem:[%s144 + $0x7a0] sm:$0xff] %v915
        %1172 = vst [vmem:[%s144 + $0x7a8] sm:$0xff] %v916
        %1173 = vst [vmem:[%s144 + $0x7b0] sm:$0xff] %v917
        %1174 = vst [vmem:[%s144 + $0x7b8] sm:$0xff] %v918
        %1175 = vst [vmem:[%s144 + $0x7c0] sm:$0xff] %v919
        %1176 = vst [vmem:[%s144 + $0x7c8] sm:$0xff] %v920
        %1177 = vst [vmem:[%s144 + $0x7d0] sm:$0xff] %v921
        %1178 = vst [vmem:[%s144 + $0x7d8] sm:$0xff] %v922
        %1179 = vst [vmem:[%s144 + $0x7e0] sm:$0xff] %v923
        %1180 = vst [vmem:[%s144 + $0x7e8] sm:$0xff] %v924
        %1181 = vst [vmem:[%s144 + $0x7f0] sm:$0xff] %v925
        %1182 = vst [vmem:[%s144 + $0x7f8] sm:$0xff] %v926
        %s1183 = sand.u32 %s56, 1
        %s1184 = scalar_lea.sflag [#allocation7], %s1183
        %s1185 = sand.u32 %s56, 1
        %s1186 = smul.addr %s1185, 2048
        %s1187 = scalar_lea.vmem [#allocation8], %s1186
        // Predicated region
        $region29: #{tpu_custom_call.1} parent=23 // pred_check
          %p1188 = pneg %p66
        $region30: #{tpu_custom_call.1} parent=23 // pred_check_branch
          %1190 = sbr.rel (%p1188) target = $region32
        $region31: #{tpu_custom_call.1} parent=23 // pred_region
          %s1191 = smul.u32 256, %s22
          %s1192 = ssub.s32 375, %s1191
          %p1193 = scmp.lt.s32.totalorder %s1192, 256
          %s1194 = scalar_select %p1193, %s1192, 256
          %s1195 = smul.u32 128, %s1194
          %s1197 = ssub.s32 32768, %s1195
          %1198 = vsyncadd %s1184, %s1197
          %p1199 = scmp.ne.s32.totalorder 0, %s1195
          %s1200 = smul.addr %s1191, 128
          %s1201 = scalar_lea.hbm %s3, %s1200
          %s1202 = smul.u32 8, %s1194
          %s1203 = sshll.u32 %s1187, 4
          %s1204 = int_to_ptr.vmem [resolvable:$true] %s1203
          %s1205 = sshll.u32 %s1202, 4
          %1209 = dma.vmem_to_hbm [thread:$0]  (%p1199), %s1204, %s1205, %s1201, %s1184, 128, 128, 8
        $region32: #{tpu_custom_call.1} parent=23 // pred_fallthru
          _
      $region24: #{tpu_custom_call.1} parent=5 // pred_fallthru
        _
      %p1210 = scmp.le.s32.totalorder 2, %s17
      // Predicated region
      $region33: #{tpu_custom_call.1} parent=5 // pred_check
        %p1211 = pneg %p1210
      $region34: #{tpu_custom_call.1} parent=5 // pred_check_branch
        %1213 = sbr.rel (%p1211) target = $region36
      $region35: #{tpu_custom_call.1} parent=5 // pred_region
        %s1214 = ssub.s32 %s17, 2
        // Predicated region
        $region37: #{tpu_custom_call.1} parent=35 // pred_check
          %p1215 = pneg %p72
        $region38: #{tpu_custom_call.1} parent=35 // pred_check_branch
          %1217 = sbr.rel (%p1215) target = $region40
        $region39: #{tpu_custom_call.1} parent=35 // pred_region
          %s1218 = sand.u32 %s57, 1
          %s1219 = scalar_lea.sflag [#allocation7], %s1218
          %s1220 = sand.u32 %s57, 1
          %s1221 = smul.addr %s1220, 2048
          %s1222 = scalar_lea.vmem [#allocation8], %s1221
          %1223 = dma.done %s1219, 32768
        $region40: #{tpu_custom_call.1} parent=35 // pred_fallthru
          _
      $region36: #{tpu_custom_call.1} parent=5 // pred_fallthru
        _
    $region6: #{tpu_custom_call.1} parent=1 // loop_footer
      %s21 = sadd.s32 1, %s17
    $region7: #{tpu_custom_call.1} parent=1 // loop_footer_branch
      %16 = sbr.rel target = $region3
    $region8: #{tpu_custom_call.1} parent=1 // loop_exit
      _
    %1224 = vsyncpa [#allocation6], 1
    %s1225 = scalar_lea.sflag [#allocation6], 1
    %1226 = vsyncpa %s1225, 1
    %1227 = vsyncpa [#allocation7], 1
    %s1228 = scalar_lea.sflag [#allocation7], 1
    %1229 = vsyncpa %s1228, 1

</llo_original>
